<compile_context>
chip_gen: v7x
topology: tpu7x:2x2x1
jax: 0.10.0
libtpu: 0.0.40
codegen_flags: <defaults>
</compile_context>

<pallas_src>
import functools

import jax
import jax.numpy as jnp
from jax.experimental import pallas as pl
from jax.experimental.pallas import tpu as pltpu

_LANE = 128
_NEG_INF = -1e30  # finite "masked logit"; exp() underflows to exactly 0


def _round_up(n, m):
    return ((n + m - 1) // m) * m


def _pick_batch_tile(B):
    """Small B: one grid step.  Larger B: >=2 grid steps (v7x dual-TC) with
    tiles capped at 2048 rows so per-step DMA amortizes pipeline overhead."""
    if B <= 256:
        return B
    return min(2048, _round_up(pl.cdiv(B, 2), 8))


def _mlp_kernel(x_ref, w1_ref, b1_ref, w2_ref, b2_ref, o_ref):
    # fc1 + ReLU: bf16 operands, f32 accumulation on the MXU.
    h = jnp.dot(x_ref[...], w1_ref[...], preferred_element_type=jnp.float32)
    h = jnp.maximum(h + b1_ref[...], 0.0)            # b1 is (1, hid_p) f32
    # fc2: cast activations back to the matmul dtype; padded b2 = -1e30 masks
    # the padded logits (padded W2^T columns are exactly zero).
    logits = jnp.dot(h.astype(w2_ref.dtype), w2_ref[...],
                     preferred_element_type=jnp.float32)
    logits = logits + b2_ref[...]                     # b2 is (1, out_p) f32
    # numerically stable softmax over the feature axis (all f32 elementwise)
    m = jnp.max(logits, axis=1, keepdims=True)
    e = jnp.exp(logits - m)                           # padded cols -> 0
    denom = jnp.sum(e, axis=1, keepdims=True)
    r = pl.reciprocal(denom, approx=True)             # EUP slot
    r = r * (2.0 - denom * r)                         # one Newton-Raphson step
    o_ref[...] = (e * r).astype(o_ref.dtype)


def prepare_params(w1, b1, w2, b2, matmul_dtype=jnp.bfloat16):
    """One-time prep: transpose + zero-pad weights to lane-aligned (x128)
    hidden/output dims and cast matmul operands to bf16.  Padded b2 entries
    get -1e30 so softmax ignores padded logits.  Biases stay f32."""
    hidden, in_size = w1.shape
    out_size = w2.shape[0]
    hid_p = _round_up(hidden, _LANE)
    out_p = _round_up(out_size, _LANE)

    w1_t = jnp.zeros((in_size, hid_p), jnp.float32).at[:, :hidden].set(w1.T)
    w2_t = jnp.zeros((hid_p, out_p), jnp.float32).at[:hidden, :out_size].set(w2.T)
    b1_p = jnp.zeros((1, hid_p), jnp.float32).at[0, :hidden].set(b1)
    b2_p = jnp.full((1, out_p), _NEG_INF, jnp.float32).at[0, :out_size].set(b2)
    return dict(w1_t=w1_t.astype(matmul_dtype), b1=b1_p,
                w2_t=w2_t.astype(matmul_dtype), b2=b2_p)


@functools.partial(jax.jit, static_argnames=("out_size",))
def simple_feedforward_nn(x, params, *, out_size):
    """x: [B, in_size] f32.  params: output of prepare_params.  out_size: static int."""
    w1_t, b1_p, w2_t, b2_p = (params["w1_t"], params["b1"],
                              params["w2_t"], params["b2"])
    B, in_size = x.shape
    hid_p = w1_t.shape[1]
    out_p = w2_t.shape[1]

    x = x.astype(w1_t.dtype)       # bf16 input -> half the x DMA bytes

    tb = _pick_batch_tile(B)
    grid = (pl.cdiv(B, tb),)

    y_pad = pl.pallas_call(
        _mlp_kernel,
        out_shape=jax.ShapeDtypeStruct((B, out_p), jnp.float32),
        grid=grid,
        in_specs=[
            pl.BlockSpec((tb, in_size), lambda i: (i, 0)),       # x tile
            pl.BlockSpec((in_size, hid_p), lambda i: (0, 0)),    # W1^T (resident)
            pl.BlockSpec((1, hid_p), lambda i: (0, 0)),          # b1   (resident)
            pl.BlockSpec((hid_p, out_p), lambda i: (0, 0)),      # W2^T (resident)
            pl.BlockSpec((1, out_p), lambda i: (0, 0)),          # b2   (resident)
        ],
        out_specs=pl.BlockSpec((tb, out_p), lambda i: (i, 0)),   # lane-dense store
        compiler_params=pltpu.CompilerParams(
            dimension_semantics=("parallel",)),                  # v7x: 2 TCs
    )(x, w1_t, b1_p, w2_t, b2_p)

    # TODO(synk): for large B, return the padded (B, out_p) buffer and consume
    # it downstream instead of materializing this slice (it re-reads the whole
    # dominant output stream).
    return y_pad[:, :out_size]


if __name__ == "__main__":
    # Small shapes consistent with the module's forward.
    batch, input_size, hidden_size, output_size = 8, 32, 64, 16

    key = jax.random.PRNGKey(0)
    kx, kw1, kb1, kw2, kb2 = jax.random.split(key, 5)

    x = jax.random.normal(kx, (batch, input_size), dtype=jnp.float32)
    # Deterministic parameter init (PyTorch-style uniform bounds, synthetic).
    bound1 = 1.0 / (input_size ** 0.5)
    w1 = jax.random.uniform(kw1, (hidden_size, input_size),
                            minval=-bound1, maxval=bound1, dtype=jnp.float32)
    b1 = jax.random.uniform(kb1, (hidden_size,),
                            minval=-bound1, maxval=bound1, dtype=jnp.float32)
    bound2 = 1.0 / (hidden_size ** 0.5)
    w2 = jax.random.uniform(kw2, (output_size, hidden_size),
                            minval=-bound2, maxval=bound2, dtype=jnp.float32)
    b2 = jax.random.uniform(kb2, (output_size,),
                            minval=-bound2, maxval=bound2, dtype=jnp.float32)

    # One-time param prep (transpose + pad + bf16 cast), out of the forward path.
    params = prepare_params(w1, b1, w2, b2)

    out = simple_feedforward_nn(x, params, out_size=output_size)
    out = jax.block_until_ready(out)

    # Reference check in plain JAX f32 (same math as the PyTorch module).
    h_ref = jnp.maximum(x @ w1.T + b1, 0.0)
    logits_ref = h_ref @ w2.T + b2
    ref = jax.nn.softmax(logits_ref, axis=1)
    assert out.shape == (batch, output_size)
    # bf16 matmul operands (f32 accumulation) -> relaxed tolerance.
    assert jnp.allclose(out, ref, atol=2e-2), "mismatch vs reference"
    assert jnp.allclose(jnp.sum(out, axis=1), 1.0, atol=1e-3)

    print("KERNEL_OK")
</pallas_src>

<mosaic_0001>
module attributes {stable_mosaic.version = 11 : i64} {
  func.func @_mlp_kernel(%arg0: i32, %arg1: memref<8x32xbf16, #tpu.memory_space<vmem>>, %arg2: memref<32x128xbf16, #tpu.memory_space<vmem>>, %arg3: memref<1x128xf32, #tpu.memory_space<vmem>>, %arg4: memref<128x128xbf16, #tpu.memory_space<vmem>>, %arg5: memref<1x128xf32, #tpu.memory_space<vmem>>, %arg6: memref<8x128xf32, #tpu.memory_space<vmem>>) attributes {dimension_semantics = [#tpu.dimension_semantics<parallel>], iteration_bounds = array<i64: 1>, scalar_prefetch = 0 : i64, scratch_operands = 0 : i64, tpu.core_type = #tpu.core_type<tc>, window_params = [{transform_indices = @transform_0, window_bounds = array<i64: 8, 32>}, {pipeline_mode = #tpu.pipeline_mode<synchronous>, transform_indices = @transform_1, window_bounds = array<i64: 32, 128>}, {pipeline_mode = #tpu.pipeline_mode<synchronous>, transform_indices = @transform_2, window_bounds = array<i64: 1, 128>}, {pipeline_mode = #tpu.pipeline_mode<synchronous>, transform_indices = @transform_3, window_bounds = array<i64: 128, 128>}, {pipeline_mode = #tpu.pipeline_mode<synchronous>, transform_indices = @transform_4, window_bounds = array<i64: 1, 128>}, {transform_indices = @transform_5, window_bounds = array<i64: 8, 128>}]} {
    %c0 = arith.constant 0 : index
    %c0_0 = arith.constant 0 : index
    %0 = vector.load %arg1[%c0, %c0_0] : memref<8x32xbf16, #tpu.memory_space<vmem>>, vector<8x32xbf16>
    %c0_1 = arith.constant 0 : index
    %c0_2 = arith.constant 0 : index
    %1 = vector.load %arg2[%c0_1, %c0_2] : memref<32x128xbf16, #tpu.memory_space<vmem>>, vector<32x128xbf16>
    %cst = arith.constant dense<0.000000e+00> : vector<8x128xf32>
    %2 = tpu.matmul %0, %1, %cst {dimension_numbers = #tpu.dot_dimension_numbers<[1], [0], [0], [1], [0, 0, 1, 1], [], []>} : vector<8x32xbf16>, vector<32x128xbf16>, vector<8x128xf32> -> vector<8x128xf32>
    %c0_3 = arith.constant 0 : index
    %c0_4 = arith.constant 0 : index
    %3 = vector.load %arg3[%c0_3, %c0_4] : memref<1x128xf32, #tpu.memory_space<vmem>>, vector<1x128xf32>
    %4 = vector.broadcast %3 : vector<1x128xf32> to vector<8x128xf32>
    %5 = arith.addf %2, %4 : vector<8x128xf32>
    %cst_5 = arith.constant 0.000000e+00 : f32
    %6 = vector.broadcast %cst_5 : f32 to vector<8x128xf32>
    %7 = arith.maximumf %5, %6 : vector<8x128xf32>
    %8 = arith.truncf %7 : vector<8x128xf32> to vector<8x128xbf16>
    %c0_6 = arith.constant 0 : index
    %c0_7 = arith.constant 0 : index
    %9 = vector.load %arg4[%c0_6, %c0_7] : memref<128x128xbf16, #tpu.memory_space<vmem>>, vector<128x128xbf16>
    %cst_8 = arith.constant dense<0.000000e+00> : vector<8x128xf32>
    %10 = tpu.matmul %8, %9, %cst_8 {dimension_numbers = #tpu.dot_dimension_numbers<[1], [0], [0], [1], [0, 0, 1, 1], [], []>} : vector<8x128xbf16>, vector<128x128xbf16>, vector<8x128xf32> -> vector<8x128xf32>
    %c0_9 = arith.constant 0 : index
    %c0_10 = arith.constant 0 : index
    %11 = vector.load %arg5[%c0_9, %c0_10] : memref<1x128xf32, #tpu.memory_space<vmem>>, vector<1x128xf32>
    %12 = vector.broadcast %11 : vector<1x128xf32> to vector<8x128xf32>
    %13 = arith.addf %10, %12 : vector<8x128xf32>
    %cst_11 = arith.constant dense<0xFF800000> : vector<8xf32>
    %14 = vector.multi_reduction <maximumf>, %13, %cst_11 [1] : vector<8x128xf32> to vector<8xf32>
    %15 = vector.shape_cast %14 : vector<8xf32> to vector<8x1xf32>
    %16 = vector.broadcast %15 : vector<8x1xf32> to vector<8x128xf32>
    %17 = arith.subf %13, %16 : vector<8x128xf32>
    %18 = math.exp %17 : vector<8x128xf32>
    %cst_12 = arith.constant dense<0.000000e+00> : vector<8xf32>
    %19 = vector.multi_reduction <add>, %18, %cst_12 [1] : vector<8x128xf32> to vector<8xf32>
    %20 = vector.shape_cast %19 : vector<8xf32> to vector<8x1xf32>
    %21 = tpu.reciprocal %20 {approx = true} : vector<8x1xf32> -> vector<8x1xf32>
    %22 = arith.mulf %20, %21 : vector<8x1xf32>
    %cst_13 = arith.constant 2.000000e+00 : f32
    %23 = vector.broadcast %cst_13 : f32 to vector<8x1xf32>
    %24 = arith.subf %23, %22 : vector<8x1xf32>
    %25 = arith.mulf %21, %24 : vector<8x1xf32>
    %26 = vector.broadcast %25 : vector<8x1xf32> to vector<8x128xf32>
    %27 = arith.mulf %18, %26 : vector<8x128xf32>
    %c0_14 = arith.constant 0 : index
    %c0_15 = arith.constant 0 : index
    %28 = vector.load %arg6[%c0_14, %c0_15] : memref<8x128xf32, #tpu.memory_space<vmem>>, vector<8x128xf32>
    tpu.vector_store %arg6[%c0_14, %c0_15], %27 {strides = array<i32>} : memref<8x128xf32, #tpu.memory_space<vmem>>, vector<8x128xf32>,
    return
  }
  func.func @transform_0(%arg0: i32) -> (i32, i32) {
    %c0_i32 = arith.constant 0 : i32
    %c0_i32_0 = arith.constant 0 : i32
    return %arg0, %c0_i32 : i32, i32
  }
  func.func @transform_1(%arg0: i32) -> (i32, i32) {
    %c0_i32 = arith.constant 0 : i32
    %c0_i32_0 = arith.constant 0 : i32
    %c0_i32_1 = arith.constant 0 : i32
    return %c0_i32, %c0_i32_0 : i32, i32
  }
  func.func @transform_2(%arg0: i32) -> (i32, i32) {
    %c0_i32 = arith.constant 0 : i32
    %c0_i32_0 = arith.constant 0 : i32
    %c0_i32_1 = arith.constant 0 : i32
    return %c0_i32, %c0_i32_0 : i32, i32
  }
  func.func @transform_3(%arg0: i32) -> (i32, i32) {
    %c0_i32 = arith.constant 0 : i32
    %c0_i32_0 = arith.constant 0 : i32
    %c0_i32_1 = arith.constant 0 : i32
    return %c0_i32, %c0_i32_0 : i32, i32
  }
  func.func @transform_4(%arg0: i32) -> (i32, i32) {
    %c0_i32 = arith.constant 0 : i32
    %c0_i32_0 = arith.constant 0 : i32
    %c0_i32_1 = arith.constant 0 : i32
    return %c0_i32, %c0_i32_0 : i32, i32
  }
  func.func @transform_5(%arg0: i32) -> (i32, i32) {
    %c0_i32 = arith.constant 0 : i32
    %c0_i32_0 = arith.constant 0 : i32
    return %arg0, %c0_i32 : i32, i32
  }
}

</mosaic_0001>

<llo_original>
// kernel: simple_feedforward_nn.1
$region0: #{simple_feedforward_nn.1}
  #allocation0 [shape = 'u32[]', space=smem, size = 0x4, offset = 0x4, fixed_abs, tag = 'smem constant byte address 0x4 - core index']
  #allocation1 [shape = 'u32[144,128]{1,0:T(1,128)}', space=vmem, size = 0x12000, scoped, tag = 'internal scratch']
  %s0 = inlined_call_operand.vmem [shape: bf16[8,32], index: 0, kind: input, shape index: {}]
  %s1 = inlined_call_operand.vmem [shape: bf16[32,128], index: 1, kind: input, shape index: {}]
  %s2 = inlined_call_operand.vmem [shape: f32[1,128], index: 2, kind: input, shape index: {}]
  %s3 = inlined_call_operand.hbm [shape: bf16[128,128], index: 3, kind: input, shape index: {}]
  %s4 = inlined_call_operand.vmem [shape: f32[1,128], index: 4, kind: input, shape index: {}]
  %s5 = inlined_call_operand.hbm [shape: f32[8,128], index: 5, kind: output, shape index: {}]
  %s6 = sld [smem:[#allocation0]]
  $region34: #{simple_feedforward_nn.1} parent=0
    _
  %s8 = ssub.s32 1, %s6
  %s9 = scalar_select 0, %s8, %s6
  $region1: #{simple_feedforward_nn.1} parent=0
    #allocation2 [shape = 'u8[32768]{0}', space=vmem, size = 0x8000, scoped, tag = 'input window, operand 3, single buffered']
    #allocation3 [shape = 's32[1]{0}', space=sflag, size = 0x4, scoped, tag = 'scoped memory for simple_feedforward_nn.1']
    #allocation4 [shape = 's32[1]{0}', space=sflag, size = 0x4, scoped, tag = 'scoped memory for simple_feedforward_nn.1']
    #allocation5 [shape = 'u8[4096]{0}', space=vmem, size = 0x1000, scoped, tag = 'output window, operand 0, single buffered']
    %10 = vsyncpa [#allocation3], 0
    %11 = vsyncpa [#allocation4], 0
    // Predicated region
    $region2: #{simple_feedforward_nn.1} parent=1 // pred_check
      _
    $region3: #{simple_feedforward_nn.1} parent=1 // pred_check_branch
      %13 = sbr.rel (0) target = $region5
    $region4: #{simple_feedforward_nn.1} parent=1 // pred_region
      _
    $region5: #{simple_feedforward_nn.1} parent=1 // pred_fallthru
      _
    // Predicated region
    $region6: #{simple_feedforward_nn.1} parent=1 // pred_check
      _
    $region7: #{simple_feedforward_nn.1} parent=1 // pred_check_branch
      %15 = sbr.rel (0) target = $region9
    $region8: #{simple_feedforward_nn.1} parent=1 // pred_region
      _
    $region9: #{simple_feedforward_nn.1} parent=1 // pred_fallthru
      _
    // Predicated region
    $region10: #{simple_feedforward_nn.1} parent=1 // pred_check
      _
    $region11: #{simple_feedforward_nn.1} parent=1 // pred_check_branch
      %17 = sbr.rel (0) target = $region13
    $region12: #{simple_feedforward_nn.1} parent=1 // pred_region
      _
    $region13: #{simple_feedforward_nn.1} parent=1 // pred_fallthru
      _
    // Predicated region
    $region14: #{simple_feedforward_nn.1} parent=1 // pred_check
      _
    $region15: #{simple_feedforward_nn.1} parent=1 // pred_check_branch
      %19 = sbr.rel (0) target = $region17
    $region16: #{simple_feedforward_nn.1} parent=1 // pred_region
      %s21 = ssub.s32 1024, 1024
      %22 = vsyncadd [#allocation3], %s21
      %s23 = sshll.u32 [#allocation2], 4
      %s24 = int_to_ptr.vmem [resolvable:$true] %s23
      %29 = dma.hbm_to_vmem [thread:$0]  %s3, 1024, %s24, [#allocation3], 64, 64, 4
    $region17: #{simple_feedforward_nn.1} parent=1 // pred_fallthru
      _
    // Predicated region
    $region18: #{simple_feedforward_nn.1} parent=1 // pred_check
      _
    $region19: #{simple_feedforward_nn.1} parent=1 // pred_check_branch
      %31 = sbr.rel (0) target = $region21
    $region20: #{simple_feedforward_nn.1} parent=1 // pred_region
      _
    $region21: #{simple_feedforward_nn.1} parent=1 // pred_fallthru
      _
    // Predicated region
    $region22: #{simple_feedforward_nn.1} parent=1 // pred_check
      _
    $region23: #{simple_feedforward_nn.1} parent=1 // pred_check_branch
      %33 = sbr.rel (0) target = $region25
    $region24: #{simple_feedforward_nn.1} parent=1 // pred_region
      %34 = dma.done [#allocation3], 1024
    $region25: #{simple_feedforward_nn.1} parent=1 // pred_fallthru
      _
    %v36 = vld [vmem:[%s0] sm:$0xf]
    %v37 = vld [vmem:[%s1] sm:$0xf]
    %v38 = vld [vmem:[%s1 + $0x4] sm:$0xf]
    %v39 = vld [vmem:[%s1 + $0x8] sm:$0xf]
    %v40 = vld [vmem:[%s1 + $0xc] sm:$0xf]
    %v41 = vld [vmem:[%s2] sm:$0x1]
    %v43 = vlaneseq
    %v44 = vshrl.u32 %v43, 7
    %v45 = vsub.s32 0, %v44
    %v46 = vrot.slane %v41, %v45
    %v52 = vunpack.c.l.b16 %v37
    %v53 = vunpack.c.l.b16 %v38
    %v54 = vunpack.c.l.b16 %v39
    %v55 = vunpack.c.l.b16 %v40
    %v56 = vpack.c.b16 %v53, %v52
    %v57 = vpack.c.b16 %v55, %v54
    %vm60 = vcmask 261120
    %v62 = vsel %vm60, %v36, 0
    %64 = vmatprep.subr.bf16.mxu0 0
    %65 = vmatpush1.bf16.msra.mxu0 %v56
    %66 = vmatprep.subr.bf16.mxu0 0
    %67 = vmatpush1.bf16.msra.mxu0 %v57
    %68 = vmatprep.subr.bf16.mxu0 0
    %69 = vmatpush1.bf16.msra.mxu0 0
    %70 = vmatprep.subr.bf16.mxu0 0
    %71 = vmatpush1.bf16.msra.mxu0 0
    %72 = vmatprep.subr.bf16.mxu0 0
    %73 = vmatpush1.bf16.msra.mxu0 0
    %74 = vmatprep.subr.bf16.mxu0 0
    %75 = vmatpush1.bf16.msra.mxu0 0
    %76 = vmatprep.subr.bf16.mxu0 0
    %77 = vmatpush1.bf16.msra.mxu0 0
    %78 = vmatprep.subr.bf16.mxu0 0
    %79 = vmatpush1.bf16.msra.mxu0 0
    %80 = vmatprep.subr.bf16.mxu0 0
    %81 = vmatpush1.bf16.msra.mxu0 0
    %82 = vmatprep.subr.bf16.mxu0 0
    %83 = vmatpush1.bf16.msra.mxu0 0
    %84 = vmatprep.subr.bf16.mxu0 0
    %85 = vmatpush1.bf16.msra.mxu0 0
    %86 = vmatprep.subr.bf16.mxu0 0
    %87 = vmatpush1.bf16.msra.mxu0 0
    %88 = vmatprep.subr.bf16.mxu0 0
    %89 = vmatpush1.bf16.msra.mxu0 0
    %90 = vmatprep.subr.bf16.mxu0 0
    %91 = vmatpush1.bf16.msra.mxu0 0
    %92 = vmatprep.subr.bf16.mxu0 0
    %93 = vmatpush1.bf16.msra.mxu0 0
    %94 = vmatprep.subr.bf16.mxu0 0
    %95 = vmatpush1.bf16.msra.mxu0 0
    %96 = vmatprep.mubr.bf16.mxu0 0
    %97 = vmatmul.mubr.bf16.gmra.mrb[0].mxu0 %v62
    %v98 = vpop.f32.mrb[0].mxu0
    %v99 = vadd.f32 %v46, %v98
    %v100 = vpop.f32.mrb[0].mxu0
    %v101 = vpop.f32.mrb[0].mxu0
    %v102 = vpop.f32.mrb[0].mxu0
    %103 = vdwg.mxu0
    %v104 = vmax.f32 %v99, 0.0
    %v105 = vpack.c.bf16 %v104, %v104
    %v106 = vld [vmem:[#allocation2] sm:$0xf]
    %v107 = vld [vmem:[#allocation2 + $0x4] sm:$0xf]
    %v108 = vld [vmem:[#allocation2 + $0x8] sm:$0xf]
    %v109 = vld [vmem:[#allocation2 + $0xc] sm:$0xf]
    %v110 = vld [vmem:[#allocation2 + $0x10] sm:$0xf]
    %v111 = vld [vmem:[#allocation2 + $0x14] sm:$0xf]
    %v112 = vld [vmem:[#allocation2 + $0x18] sm:$0xf]
    %v113 = vld [vmem:[#allocation2 + $0x1c] sm:$0xf]
    %v114 = vld [vmem:[#allocation2 + $0x20] sm:$0xf]
    %v115 = vld [vmem:[#allocation2 + $0x24] sm:$0xf]
    %v116 = vld [vmem:[#allocation2 + $0x28] sm:$0xf]
    %v117 = vld [vmem:[#allocation2 + $0x2c] sm:$0xf]
    %v118 = vld [vmem:[#allocation2 + $0x30] sm:$0xf]
    %v119 = vld [vmem:[#allocation2 + $0x34] sm:$0xf]
    %v120 = vld [vmem:[#allocation2 + $0x38] sm:$0xf]
    %v121 = vld [vmem:[#allocation2 + $0x3c] sm:$0xf]
    %v122 = vld [vmem:[%s4] sm:$0x1]
    %v124 = vlaneseq
    %v125 = vshrl.u32 %v124, 7
    %v126 = vsub.s32 0, %v125
    %v127 = vrot.slane %v122, %v126
    %v145 = vunpack.c.l.b16 %v106
    %v146 = vunpack.c.l.b16 %v107
    %v147 = vunpack.c.l.b16 %v108
    %v148 = vunpack.c.l.b16 %v109
    %v149 = vunpack.c.l.b16 %v110
    %v150 = vunpack.c.l.b16 %v111
    %v151 = vunpack.c.l.b16 %v112
    %v152 = vunpack.c.l.b16 %v113
    %v153 = vunpack.c.l.b16 %v114
    %v154 = vunpack.c.l.b16 %v115
    %v155 = vunpack.c.l.b16 %v116
    %v156 = vunpack.c.l.b16 %v117
    %v157 = vunpack.c.l.b16 %v118
    %v158 = vunpack.c.l.b16 %v119
    %v159 = vunpack.c.l.b16 %v120
    %v160 = vunpack.c.l.b16 %v121
    %v161 = vpack.c.b16 %v146, %v145
    %v162 = vpack.c.b16 %v148, %v147
    %v163 = vpack.c.b16 %v150, %v149
    %v164 = vpack.c.b16 %v152, %v151
    %v165 = vpack.c.b16 %v154, %v153
    %v166 = vpack.c.b16 %v156, %v155
    %v167 = vpack.c.b16 %v158, %v157
    %v168 = vpack.c.b16 %v160, %v159
    %177 = vmatprep.subr.bf16.mxu0 0
    %178 = vmatpush1.bf16.msra.mxu0 %v161
    %179 = vmatprep.subr.bf16.mxu0 0
    %180 = vmatpush1.bf16.msra.mxu0 %v162
    %181 = vmatprep.subr.bf16.mxu0 0
    %182 = vmatpush1.bf16.msra.mxu0 %v163
    %183 = vmatprep.subr.bf16.mxu0 0
    %184 = vmatpush1.bf16.msra.mxu0 %v164
    %185 = vmatprep.subr.bf16.mxu0 0
    %186 = vmatpush1.bf16.msra.mxu0 %v165
    %187 = vmatprep.subr.bf16.mxu0 0
    %188 = vmatpush1.bf16.msra.mxu0 %v166
    %189 = vmatprep.subr.bf16.mxu0 0
    %190 = vmatpush1.bf16.msra.mxu0 %v167
    %191 = vmatprep.subr.bf16.mxu0 0
    %192 = vmatpush1.bf16.msra.mxu0 %v168
    %193 = vmatprep.subr.bf16.mxu0 0
    %194 = vmatpush1.bf16.msra.mxu0 0
    %195 = vmatprep.subr.bf16.mxu0 0
    %196 = vmatpush1.bf16.msra.mxu0 0
    %197 = vmatprep.subr.bf16.mxu0 0
    %198 = vmatpush1.bf16.msra.mxu0 0
    %199 = vmatprep.subr.bf16.mxu0 0
    %200 = vmatpush1.bf16.msra.mxu0 0
    %201 = vmatprep.subr.bf16.mxu0 0
    %202 = vmatpush1.bf16.msra.mxu0 0
    %203 = vmatprep.subr.bf16.mxu0 0
    %204 = vmatpush1.bf16.msra.mxu0 0
    %205 = vmatprep.subr.bf16.mxu0 0
    %206 = vmatpush1.bf16.msra.mxu0 0
    %207 = vmatprep.subr.bf16.mxu0 0
    %208 = vmatpush1.bf16.msra.mxu0 0
    %209 = vmatprep.mubr.bf16.mxu0 0
    %210 = vmatmul.mubr.bf16.gmra.mrb[0].mxu0 %v105
    %v211 = vpop.f32.mrb[0].mxu0
    %v212 = vadd.f32 %v127, %v211
    %v213 = vpop.f32.mrb[0].mxu0
    %v214 = vpop.f32.mrb[0].mxu0
    %v215 = vpop.f32.mrb[0].mxu0
    %216 = vdwg.mxu0
    %217 = vmax.xlane.f32.xlu0 %v212
    %v218 = vpop.xlane.xlu0 %217
    %v219 = vsub.f32 %v212, %v218
    %v220 = vmul.f32 %v219, 1.442695
    %v221 = vpow.pop %v220
    %222 = vadd.xlane.f32.xlu0 %v221
    %v223 = vpop.xlane.xlu0 %222
    %v224 = vrcp.pop %v223
    %v225 = vmul.f32 %v223, %v224
    %v226 = vsub.f32 2.0, %v225
    %v227 = vmul.f32 %v224, %v226
    %v228 = vmul.f32 %v221, %v227
    %229 = vst [vmem:[#allocation5] sm:$0xff] %v228
    // Predicated region
    $region26: #{simple_feedforward_nn.1} parent=1 // pred_check
      _
    $region27: #{simple_feedforward_nn.1} parent=1 // pred_check_branch
      %231 = sbr.rel (0) target = $region29
    $region28: #{simple_feedforward_nn.1} parent=1 // pred_region
      %s233 = ssub.s32 128, 128
      %234 = vsyncadd [#allocation4], %s233
      %s236 = sshll.u32 [#allocation5], 4
      %s237 = int_to_ptr.vmem [resolvable:$true] %s236
      %239 = dma.vmem_to_hbm [thread:$0]  %s237, 128, %s5, [#allocation4]
    $region29: #{simple_feedforward_nn.1} parent=1 // pred_fallthru
      _
    // Predicated region
    $region30: #{simple_feedforward_nn.1} parent=1 // pred_check
      _
    $region31: #{simple_feedforward_nn.1} parent=1 // pred_check_branch
      %241 = sbr.rel (0) target = $region33
    $region32: #{simple_feedforward_nn.1} parent=1 // pred_region
      %242 = dma.done [#allocation4], 128
    $region33: #{simple_feedforward_nn.1} parent=1 // pred_fallthru
      _
    %243 = vsyncpa [#allocation3], 1
    %244 = vsyncpa [#allocation4], 1

</llo_original>
